<compile_context>
chip_gen: v5e
topology: v5e:2x2
jax: 0.10.0
libtpu: 0.0.40
codegen_flags: <defaults>
</compile_context>

<pallas_src>
import jax
import jax.numpy as jnp
from jax.experimental import pallas as pl
from jax.experimental.pallas import tpu as pltpu

# ---- small, module-consistent shapes (scaled down from n_embed=384/block=256) ----
B = 2            # batch
T = 16           # sequence length (<= block_size)
N_EMBED = 64     # embedding dim C
N_HEADS = 4
HEAD_SIZE = 16   # n_heads * head_size == n_embed


# ----------------------------------------------------------------------------
# Fused kernel: per batch element, do
#   qkv = x @ W_qkv              (one lane-dense matmul for all heads, q/k/v)
#   per-head causal softmax attention (static lane slices of qkv)
#   concat heads (lane axis) -> output projection + bias -> (T, C) lane-dense
# ----------------------------------------------------------------------------
def fused_mha_kernel(x_ref, wqkv_ref, wproj_ref, bproj_ref, out_ref):
    # x_ref: (1, T, C)  wqkv_ref: (C, 3*H*Hs)  wproj_ref: (H*Hs, C)
    # bproj_ref: (1, C) out_ref: (1, T, C)
    x = x_ref[0]                                   # (T, C)
    t, c = x.shape
    h_count, hs = N_HEADS, HEAD_SIZE

    # One big QKV projection for all heads (lane-dense: 3*H*Hs = 192 columns).
    qkv = jnp.dot(x, wqkv_ref[...], preferred_element_type=jnp.float32)  # (T, 3*H*Hs)

    # NOTE: the reference scales by C ** -0.5 where C = n_embed (not head_size),
    # matching the PyTorch module.
    scale = float(c) ** -0.5

    # Causal mask (shared across heads).
    row = jax.lax.broadcasted_iota(jnp.int32, (t, t), 0)
    col = jax.lax.broadcasted_iota(jnp.int32, (t, t), 1)
    causal = col <= row

    # Contract on the last axis of both operands -> no explicit k transpose.
    dn = (((1,), (1,)), ((), ()))

    head_outs = []
    for h in range(h_count):                       # static unroll (H = 4)
        q = qkv[:, h * hs:(h + 1) * hs]                        # (T, Hs)
        k = qkv[:, (h_count + h) * hs:(h_count + h + 1) * hs]  # (T, Hs)
        v = qkv[:, (2 * h_count + h) * hs:(2 * h_count + h + 1) * hs]

        s = jax.lax.dot_general(q, k, dn,
                                preferred_element_type=jnp.float32) * scale  # (T, T)
        s = jnp.where(causal, s, -jnp.inf)

        # numerically-stable softmax; reciprocal on the EUP slot.
        s = s - jnp.max(s, axis=-1, keepdims=True)
        p = jnp.exp(s)
        p = p * pl.reciprocal(jnp.sum(p, axis=-1, keepdims=True), approx=True)

        head_outs.append(jnp.dot(p, v, preferred_element_type=jnp.float32))  # (T, Hs)

    # Head-concatenated, lane-dense activation (== torch.cat(..., dim=-1)).
    o = jnp.concatenate(head_outs, axis=-1)                     # (T, H*Hs)

    # Output projection + bias, fused into the same kernel.
    y = jnp.dot(o, wproj_ref[...], preferred_element_type=jnp.float32)
    y = y + bproj_ref[...]                                      # (1, C) broadcast
    out_ref[0] = y.astype(out_ref.dtype)


def multi_head_attention_forward(x, params):
    """x: (B, T, C) -> (B, T, C).  Single pallas_call, grid over batch only."""
    Bb, Tt, Cc = x.shape
    w_qkv = params["w_qkv"]      # (C, 3*H*Hs)
    w_proj = params["w_proj"]    # (H*Hs, C)
    b_proj = params["b_proj"]    # (1, C)

    return pl.pallas_call(
        fused_mha_kernel,
        out_shape=jax.ShapeDtypeStruct((Bb, Tt, Cc), x.dtype),
        grid_spec=pltpu.PrefetchScalarGridSpec(
            num_scalar_prefetch=0,
            grid=(Bb,),
            in_specs=[
                pl.BlockSpec((1, Tt, Cc), lambda b: (b, 0, 0)),
                pl.BlockSpec(w_qkv.shape, lambda b: (0, 0)),
                pl.BlockSpec(w_proj.shape, lambda b: (0, 0)),
                pl.BlockSpec(b_proj.shape, lambda b: (0, 0)),
            ],
            out_specs=pl.BlockSpec((1, Tt, Cc), lambda b: (b, 0, 0)),
        ),
        compiler_params=pltpu.CompilerParams(
            # parallel batch axis -> both TensorCores on v7x
            dimension_semantics=("parallel",)),
    )(x, w_qkv, w_proj, b_proj)


# ----------------------------------------------------------------------------
# Pure-JAX reference (mirrors the PyTorch forward, dropout in eval mode)
# ----------------------------------------------------------------------------
def reference_forward(x, params):
    Bb, Tt, Cc = x.shape
    outs = []
    for h in range(N_HEADS):
        q = x @ params["wq"][h]
        k = x @ params["wk"][h]
        v = x @ params["wv"][h]
        wei = (q @ jnp.swapaxes(k, -2, -1)) * (Cc ** -0.5)
        mask = jnp.tril(jnp.ones((Tt, Tt), dtype=bool))
        wei = jnp.where(mask, wei, -jnp.inf)
        wei = jax.nn.softmax(wei, axis=-1)
        outs.append(wei @ v)
    cat = jnp.concatenate(outs, axis=-1)
    return cat @ params["w_proj"] + params["b_proj"][0]


def init_params(key):
    ks = jax.random.split(key, 5)
    scale_in = 1.0 / jnp.sqrt(N_EMBED)
    scale_proj = 1.0 / jnp.sqrt(N_HEADS * HEAD_SIZE)

    # per-head projection weights, pre-transposed: (H, C, Hs)
    wq = jax.random.uniform(ks[0], (N_HEADS, N_EMBED, HEAD_SIZE),
                            jnp.float32, -scale_in, scale_in)
    wk = jax.random.uniform(ks[1], (N_HEADS, N_EMBED, HEAD_SIZE),
                            jnp.float32, -scale_in, scale_in)
    wv = jax.random.uniform(ks[2], (N_HEADS, N_EMBED, HEAD_SIZE),
                            jnp.float32, -scale_in, scale_in)
    w_proj = jax.random.uniform(ks[3], (N_HEADS * HEAD_SIZE, N_EMBED),
                                jnp.float32, -scale_proj, scale_proj)
    b_proj = jax.random.uniform(ks[4], (1, N_EMBED),
                                jnp.float32, -scale_proj, scale_proj)

    # Fused QKV weight, lane-dense: (C, 3*H*Hs) with columns
    #   [ q_h0 | ... | q_h{H-1} | k_h0 | ... | k_h{H-1} | v_h0 | ... | v_h{H-1} ]
    def pack(w):  # (H, C, Hs) -> (C, H*Hs)
        return jnp.transpose(w, (1, 0, 2)).reshape(N_EMBED, N_HEADS * HEAD_SIZE)

    w_qkv = jnp.concatenate([pack(wq), pack(wk), pack(wv)], axis=-1)

    return {"wq": wq, "wk": wk, "wv": wv,
            "w_qkv": w_qkv, "w_proj": w_proj, "b_proj": b_proj}


if __name__ == "__main__":
    key = jax.random.PRNGKey(0)
    k_x, k_p = jax.random.split(key)
    x = jax.random.normal(k_x, (B, T, N_EMBED), dtype=jnp.float32)
    params = init_params(k_p)

    out = jax.block_until_ready(multi_head_attention_forward(x, params))
    ref = jax.block_until_ready(reference_forward(x, params))

    assert out.shape == (B, T, N_EMBED), out.shape
    max_err = float(jnp.max(jnp.abs(out - ref)))
    # approx=True reciprocal introduces ~1e-4 relative error in the softmax
    # denominator; 2e-3 absolute tolerance is comfortably above that.
    assert max_err < 2e-3, max_err
    print("KERNEL_OK")
</pallas_src>

<mosaic_0001>
module attributes {stable_mosaic.version = 11 : i64} {
  func.func @fused_mha_kernel(%arg0: i32, %arg1: memref<1x16x64xf32, #tpu.memory_space<vmem>>, %arg2: memref<64x192xf32, #tpu.memory_space<vmem>>, %arg3: memref<64x64xf32, #tpu.memory_space<vmem>>, %arg4: memref<1x64xf32, #tpu.memory_space<vmem>>, %arg5: memref<1x16x64xf32, #tpu.memory_space<vmem>>) attributes {dimension_semantics = [#tpu.dimension_semantics<parallel>], iteration_bounds = array<i64: 2>, scalar_prefetch = 0 : i64, scratch_operands = 0 : i64, tpu.core_type = #tpu.core_type<tc>, window_params = [{transform_indices = @transform_0, window_bounds = array<i64: 1, 16, 64>}, {pipeline_mode = #tpu.pipeline_mode<synchronous>, transform_indices = @transform_1, window_bounds = array<i64: 64, 192>}, {pipeline_mode = #tpu.pipeline_mode<synchronous>, transform_indices = @transform_2, window_bounds = array<i64: 64, 64>}, {pipeline_mode = #tpu.pipeline_mode<synchronous>, transform_indices = @transform_3, window_bounds = array<i64: 1, 64>}, {transform_indices = @transform_4, window_bounds = array<i64: 1, 16, 64>}]} {
    %c0 = arith.constant 0 : index
    %c0_0 = arith.constant 0 : index
    %c0_1 = arith.constant 0 : index
    %0 = vector.load %arg1[%c0, %c0_0, %c0_1] : memref<1x16x64xf32, #tpu.memory_space<vmem>>, vector<1x16x64xf32>
    %1 = vector.shape_cast %0 : vector<1x16x64xf32> to vector<16x64xf32>
    %c0_2 = arith.constant 0 : index
    %c0_3 = arith.constant 0 : index
    %2 = vector.load %arg2[%c0_2, %c0_3] : memref<64x192xf32, #tpu.memory_space<vmem>>, vector<64x192xf32>
    %cst = arith.constant dense<0.000000e+00> : vector<16x192xf32>
    %3 = tpu.matmul %1, %2, %cst {dimension_numbers = #tpu.dot_dimension_numbers<[1], [0], [0], [1], [0, 0, 1, 1], [], []>} : vector<16x64xf32>, vector<64x192xf32>, vector<16x192xf32> -> vector<16x192xf32>
    %4 = tpu.iota {dimensions = array<i32: 0>} : vector<16x16xi32>
    %5 = tpu.iota {dimensions = array<i32: 1>} : vector<16x16xi32>
    %6 = arith.cmpi sle, %5, %4 : vector<16x16xi32>
    %7 = vector.extract_strided_slice %3 {offsets = [0, 0], sizes = [16, 16], strides = [1, 1]} : vector<16x192xf32> to vector<16x16xf32>
    %8 = vector.extract_strided_slice %3 {offsets = [0, 64], sizes = [16, 16], strides = [1, 1]} : vector<16x192xf32> to vector<16x16xf32>
    %9 = vector.extract_strided_slice %3 {offsets = [0, 128], sizes = [16, 16], strides = [1, 1]} : vector<16x192xf32> to vector<16x16xf32>
    %cst_4 = arith.constant dense<0.000000e+00> : vector<16x16xf32>
    %10 = tpu.matmul %7, %8, %cst_4 {dimension_numbers = #tpu.dot_dimension_numbers<[1], [1], [0], [0], [0, 0, 1, 0], [], []>} : vector<16x16xf32>, vector<16x16xf32>, vector<16x16xf32> -> vector<16x16xf32>
    %cst_5 = arith.constant 1.250000e-01 : f32
    %11 = vector.broadcast %cst_5 : f32 to vector<16x16xf32>
    %12 = arith.mulf %10, %11 : vector<16x16xf32>
    %cst_6 = arith.constant 0xFF800000 : f32
    %13 = vector.broadcast %cst_6 : f32 to vector<16x16xf32>
    %14 = arith.select %6, %12, %13 : vector<16x16xi1>, vector<16x16xf32>
    %cst_7 = arith.constant dense<0xFF800000> : vector<16xf32>
    %15 = vector.multi_reduction <maximumf>, %14, %cst_7 [1] : vector<16x16xf32> to vector<16xf32>
    %16 = vector.shape_cast %15 : vector<16xf32> to vector<16x1xf32>
    %17 = vector.broadcast %16 : vector<16x1xf32> to vector<16x16xf32>
    %18 = arith.subf %14, %17 : vector<16x16xf32>
    %19 = math.exp %18 : vector<16x16xf32>
    %cst_8 = arith.constant dense<0.000000e+00> : vector<16xf32>
    %20 = vector.multi_reduction <add>, %19, %cst_8 [1] : vector<16x16xf32> to vector<16xf32>
    %21 = vector.shape_cast %20 : vector<16xf32> to vector<16x1xf32>
    %22 = tpu.reciprocal %21 {approx = true} : vector<16x1xf32> -> vector<16x1xf32>
    %23 = vector.broadcast %22 : vector<16x1xf32> to vector<16x16xf32>
    %24 = arith.mulf %19, %23 : vector<16x16xf32>
    %cst_9 = arith.constant dense<0.000000e+00> : vector<16x16xf32>
    %25 = tpu.matmul %24, %9, %cst_9 {dimension_numbers = #tpu.dot_dimension_numbers<[1], [0], [0], [1], [0, 0, 1, 1], [], []>} : vector<16x16xf32>, vector<16x16xf32>, vector<16x16xf32> -> vector<16x16xf32>
    %26 = vector.extract_strided_slice %3 {offsets = [0, 16], sizes = [16, 16], strides = [1, 1]} : vector<16x192xf32> to vector<16x16xf32>
    %27 = vector.extract_strided_slice %3 {offsets = [0, 80], sizes = [16, 16], strides = [1, 1]} : vector<16x192xf32> to vector<16x16xf32>
    %28 = vector.extract_strided_slice %3 {offsets = [0, 144], sizes = [16, 16], strides = [1, 1]} : vector<16x192xf32> to vector<16x16xf32>
    %cst_10 = arith.constant dense<0.000000e+00> : vector<16x16xf32>
    %29 = tpu.matmul %26, %27, %cst_10 {dimension_numbers = #tpu.dot_dimension_numbers<[1], [1], [0], [0], [0, 0, 1, 0], [], []>} : vector<16x16xf32>, vector<16x16xf32>, vector<16x16xf32> -> vector<16x16xf32>
    %cst_11 = arith.constant 1.250000e-01 : f32
    %30 = vector.broadcast %cst_11 : f32 to vector<16x16xf32>
    %31 = arith.mulf %29, %30 : vector<16x16xf32>
    %cst_12 = arith.constant 0xFF800000 : f32
    %32 = vector.broadcast %cst_12 : f32 to vector<16x16xf32>
    %33 = arith.select %6, %31, %32 : vector<16x16xi1>, vector<16x16xf32>
    %cst_13 = arith.constant dense<0xFF800000> : vector<16xf32>
    %34 = vector.multi_reduction <maximumf>, %33, %cst_13 [1] : vector<16x16xf32> to vector<16xf32>
    %35 = vector.shape_cast %34 : vector<16xf32> to vector<16x1xf32>
    %36 = vector.broadcast %35 : vector<16x1xf32> to vector<16x16xf32>
    %37 = arith.subf %33, %36 : vector<16x16xf32>
    %38 = math.exp %37 : vector<16x16xf32>
    %cst_14 = arith.constant dense<0.000000e+00> : vector<16xf32>
    %39 = vector.multi_reduction <add>, %38, %cst_14 [1] : vector<16x16xf32> to vector<16xf32>
    %40 = vector.shape_cast %39 : vector<16xf32> to vector<16x1xf32>
    %41 = tpu.reciprocal %40 {approx = true} : vector<16x1xf32> -> vector<16x1xf32>
    %42 = vector.broadcast %41 : vector<16x1xf32> to vector<16x16xf32>
    %43 = arith.mulf %38, %42 : vector<16x16xf32>
    %cst_15 = arith.constant dense<0.000000e+00> : vector<16x16xf32>
    %44 = tpu.matmul %43, %28, %cst_15 {dimension_numbers = #tpu.dot_dimension_numbers<[1], [0], [0], [1], [0, 0, 1, 1], [], []>} : vector<16x16xf32>, vector<16x16xf32>, vector<16x16xf32> -> vector<16x16xf32>
    %45 = vector.extract_strided_slice %3 {offsets = [0, 32], sizes = [16, 16], strides = [1, 1]} : vector<16x192xf32> to vector<16x16xf32>
    %46 = vector.extract_strided_slice %3 {offsets = [0, 96], sizes = [16, 16], strides = [1, 1]} : vector<16x192xf32> to vector<16x16xf32>
    %47 = vector.extract_strided_slice %3 {offsets = [0, 160], sizes = [16, 16], strides = [1, 1]} : vector<16x192xf32> to vector<16x16xf32>
    %cst_16 = arith.constant dense<0.000000e+00> : vector<16x16xf32>
    %48 = tpu.matmul %45, %46, %cst_16 {dimension_numbers = #tpu.dot_dimension_numbers<[1], [1], [0], [0], [0, 0, 1, 0], [], []>} : vector<16x16xf32>, vector<16x16xf32>, vector<16x16xf32> -> vector<16x16xf32>
    %cst_17 = arith.constant 1.250000e-01 : f32
    %49 = vector.broadcast %cst_17 : f32 to vector<16x16xf32>
    %50 = arith.mulf %48, %49 : vector<16x16xf32>
    %cst_18 = arith.constant 0xFF800000 : f32
    %51 = vector.broadcast %cst_18 : f32 to vector<16x16xf32>
    %52 = arith.select %6, %50, %51 : vector<16x16xi1>, vector<16x16xf32>
    %cst_19 = arith.constant dense<0xFF800000> : vector<16xf32>
    %53 = vector.multi_reduction <maximumf>, %52, %cst_19 [1] : vector<16x16xf32> to vector<16xf32>
    %54 = vector.shape_cast %53 : vector<16xf32> to vector<16x1xf32>
    %55 = vector.broadcast %54 : vector<16x1xf32> to vector<16x16xf32>
    %56 = arith.subf %52, %55 : vector<16x16xf32>
    %57 = math.exp %56 : vector<16x16xf32>
    %cst_20 = arith.constant dense<0.000000e+00> : vector<16xf32>
    %58 = vector.multi_reduction <add>, %57, %cst_20 [1] : vector<16x16xf32> to vector<16xf32>
    %59 = vector.shape_cast %58 : vector<16xf32> to vector<16x1xf32>
    %60 = tpu.reciprocal %59 {approx = true} : vector<16x1xf32> -> vector<16x1xf32>
    %61 = vector.broadcast %60 : vector<16x1xf32> to vector<16x16xf32>
    %62 = arith.mulf %57, %61 : vector<16x16xf32>
    %cst_21 = arith.constant dense<0.000000e+00> : vector<16x16xf32>
    %63 = tpu.matmul %62, %47, %cst_21 {dimension_numbers = #tpu.dot_dimension_numbers<[1], [0], [0], [1], [0, 0, 1, 1], [], []>} : vector<16x16xf32>, vector<16x16xf32>, vector<16x16xf32> -> vector<16x16xf32>
    %64 = vector.extract_strided_slice %3 {offsets = [0, 48], sizes = [16, 16], strides = [1, 1]} : vector<16x192xf32> to vector<16x16xf32>
    %65 = vector.extract_strided_slice %3 {offsets = [0, 112], sizes = [16, 16], strides = [1, 1]} : vector<16x192xf32> to vector<16x16xf32>
    %66 = vector.extract_strided_slice %3 {offsets = [0, 176], sizes = [16, 16], strides = [1, 1]} : vector<16x192xf32> to vector<16x16xf32>
    %cst_22 = arith.constant dense<0.000000e+00> : vector<16x16xf32>
    %67 = tpu.matmul %64, %65, %cst_22 {dimension_numbers = #tpu.dot_dimension_numbers<[1], [1], [0], [0], [0, 0, 1, 0], [], []>} : vector<16x16xf32>, vector<16x16xf32>, vector<16x16xf32> -> vector<16x16xf32>
    %cst_23 = arith.constant 1.250000e-01 : f32
    %68 = vector.broadcast %cst_23 : f32 to vector<16x16xf32>
    %69 = arith.mulf %67, %68 : vector<16x16xf32>
    %cst_24 = arith.constant 0xFF800000 : f32
    %70 = vector.broadcast %cst_24 : f32 to vector<16x16xf32>
    %71 = arith.select %6, %69, %70 : vector<16x16xi1>, vector<16x16xf32>
    %cst_25 = arith.constant dense<0xFF800000> : vector<16xf32>
    %72 = vector.multi_reduction <maximumf>, %71, %cst_25 [1] : vector<16x16xf32> to vector<16xf32>
    %73 = vector.shape_cast %72 : vector<16xf32> to vector<16x1xf32>
    %74 = vector.broadcast %73 : vector<16x1xf32> to vector<16x16xf32>
    %75 = arith.subf %71, %74 : vector<16x16xf32>
    %76 = math.exp %75 : vector<16x16xf32>
    %cst_26 = arith.constant dense<0.000000e+00> : vector<16xf32>
    %77 = vector.multi_reduction <add>, %76, %cst_26 [1] : vector<16x16xf32> to vector<16xf32>
    %78 = vector.shape_cast %77 : vector<16xf32> to vector<16x1xf32>
    %79 = tpu.reciprocal %78 {approx = true} : vector<16x1xf32> -> vector<16x1xf32>
    %80 = vector.broadcast %79 : vector<16x1xf32> to vector<16x16xf32>
    %81 = arith.mulf %76, %80 : vector<16x16xf32>
    %cst_27 = arith.constant dense<0.000000e+00> : vector<16x16xf32>
    %82 = tpu.matmul %81, %66, %cst_27 {dimension_numbers = #tpu.dot_dimension_numbers<[1], [0], [0], [1], [0, 0, 1, 1], [], []>} : vector<16x16xf32>, vector<16x16xf32>, vector<16x16xf32> -> vector<16x16xf32>
    %83 = tpu.concatenate %25, %44, %63, %82 in 1 : vector<16x16xf32>, vector<16x16xf32>, vector<16x16xf32>, vector<16x16xf32> -> vector<16x64xf32>
    %c0_28 = arith.constant 0 : index
    %c0_29 = arith.constant 0 : index
    %84 = vector.load %arg3[%c0_28, %c0_29] : memref<64x64xf32, #tpu.memory_space<vmem>>, vector<64x64xf32>
    %cst_30 = arith.constant dense<0.000000e+00> : vector<16x64xf32>
    %85 = tpu.matmul %83, %84, %cst_30 {dimension_numbers = #tpu.dot_dimension_numbers<[1], [0], [0], [1], [0, 0, 1, 1], [], []>} : vector<16x64xf32>, vector<64x64xf32>, vector<16x64xf32> -> vector<16x64xf32>
    %c0_31 = arith.constant 0 : index
    %c0_32 = arith.constant 0 : index
    %86 = vector.load %arg4[%c0_31, %c0_32] : memref<1x64xf32, #tpu.memory_space<vmem>>, vector<1x64xf32>
    %87 = vector.broadcast %86 : vector<1x64xf32> to vector<16x64xf32>
    %88 = arith.addf %85, %87 : vector<16x64xf32>
    %c0_33 = arith.constant 0 : index
    %c0_34 = arith.constant 0 : index
    %c0_35 = arith.constant 0 : index
    %89 = vector.load %arg5[%c0_33, %c0_34, %c0_35] : memref<1x16x64xf32, #tpu.memory_space<vmem>>, vector<1x16x64xf32>
    %90 = vector.shape_cast %89 : vector<1x16x64xf32> to vector<16x64xf32>
    %91 = vector.shape_cast %88 : vector<16x64xf32> to vector<1x16x64xf32>
    tpu.vector_store %arg5[%c0_33, %c0_34, %c0_35], %91 {strides = array<i32>} : memref<1x16x64xf32, #tpu.memory_space<vmem>>, vector<1x16x64xf32>,
    return
  }
  func.func @transform_0(%arg0: i32) -> (i32, i32, i32) {
    %c0_i32 = arith.constant 0 : i32
    %c0_i32_0 = arith.constant 0 : i32
    %c0_i32_1 = arith.constant 0 : i32
    return %arg0, %c0_i32, %c0_i32_0 : i32, i32, i32
  }
  func.func @transform_1(%arg0: i32) -> (i32, i32) {
    %c0_i32 = arith.constant 0 : i32
    %c0_i32_0 = arith.constant 0 : i32
    %c0_i32_1 = arith.constant 0 : i32
    return %c0_i32, %c0_i32_0 : i32, i32
  }
  func.func @transform_2(%arg0: i32) -> (i32, i32) {
    %c0_i32 = arith.constant 0 : i32
    %c0_i32_0 = arith.constant 0 : i32
    %c0_i32_1 = arith.constant 0 : i32
    return %c0_i32, %c0_i32_0 : i32, i32
  }
  func.func @transform_3(%arg0: i32) -> (i32, i32) {
    %c0_i32 = arith.constant 0 : i32
    %c0_i32_0 = arith.constant 0 : i32
    %c0_i32_1 = arith.constant 0 : i32
    return %c0_i32, %c0_i32_0 : i32, i32
  }
  func.func @transform_4(%arg0: i32) -> (i32, i32, i32) {
    %c0_i32 = arith.constant 0 : i32
    %c0_i32_0 = arith.constant 0 : i32
    %c0_i32_1 = arith.constant 0 : i32
    return %arg0, %c0_i32, %c0_i32_0 : i32, i32, i32
  }
}

</mosaic_0001>

<llo_original>
// kernel: tpu_custom_call.1
$region0: #{tpu_custom_call.1}
  #allocation0 [shape = 'u32[]', space=smem, size = 0x4, offset = 0x4, fixed_abs, tag = 'smem constant byte address 0x4 - core index']
  #allocation1 [shape = 'u32[72,128]{1,0:T(1,128)}', space=vmem, size = 0x9000, scoped, tag = 'internal scratch']
  %s0 = inlined_call_operand.hbm [shape: f32[2,16,64], index: 0, kind: input, shape index: {}]
  %s1 = inlined_call_operand.hbm [shape: f32[64,192], index: 1, kind: input, shape index: {}]
  %s2 = inlined_call_operand.hbm [shape: f32[64,64], index: 2, kind: input, shape index: {}]
  %s3 = inlined_call_operand.vmem [shape: f32[1,64], index: 3, kind: input, shape index: {}]
  %s4 = inlined_call_operand.hbm [shape: f32[2,16,64], index: 4, kind: output, shape index: {}]
  %s5 = sld [smem:[#allocation0]]
  $region61: #{tpu_custom_call.1} parent=0
    _
  %s7 = ssub.s32 1, %s5
  %s8 = scalar_select 0, %s7, %s5
  $region1: #{tpu_custom_call.1} parent=0
    #allocation2 [shape = 'u8[16384]{0}', space=vmem, size = 0x4000, scoped, tag = 'input window, operand 0']
    #allocation3 [shape = 's32[2]{0}', space=sflag, size = 0x8, scoped, tag = 'scoped memory for tpu_custom_call.1']
    #allocation4 [shape = 's32[2]{0}', space=sflag, size = 0x8, scoped, tag = 'scoped memory for tpu_custom_call.1']
    #allocation5 [shape = 'u8[65536]{0}', space=vmem, size = 0x10000, scoped, tag = 'input window, operand 1, single buffered']
    #allocation6 [shape = 's32[1]{0}', space=sflag, size = 0x4, scoped, tag = 'scoped memory for tpu_custom_call.1']
    #allocation7 [shape = 'u8[32768]{0}', space=vmem, size = 0x8000, scoped, tag = 'input window, operand 2, single buffered']
    #allocation8 [shape = 'u8[16384]{0}', space=vmem, size = 0x4000, scoped, tag = 'output window, operand 0']
    %9 = vsyncpa [#allocation3], 0
    %s10 = scalar_lea.sflag [#allocation3], 1
    %11 = vsyncpa %s10, 0
    %12 = vsyncpa [#allocation6], 0
    %13 = vsyncpa [#allocation4], 0
    %s14 = scalar_lea.sflag [#allocation4], 1
    %15 = vsyncpa %s14, 0
    loop: start=0, step=1, limit=4
    $region2: #{tpu_custom_call.1} parent=1 // loop_pre_header
      _
    $region3: #{tpu_custom_call.1} parent=1 // loop_header
      %s17 = sphi 0, %s21
      %p18 = scmp.ge.s32.totalorder %s17, 4
      %s27 = sphi 0, %s29
      %s30 = sphi 0, %s27
      %s31 = sphi 0, %s30
      %s47 = sphi 0, %s31
      %s51 = sphi 0, %s51
      %s53 = sphi 0, %s51
      %s54 = sphi 0, %s53
      %s68 = sphi 0, %s54
      %s72 = sphi 0, %s72
      %s74 = sphi 0, %s72
      %s75 = sphi 0, %s74
      %s89 = sphi 0, %s75
      %s93 = sphi 0, %s93
      %s95 = sphi 0, %s93
      %s96 = sphi 0, %s95
      %s110 = sphi 0, %s96
      %s116 = sphi 0, %s118
      %s119 = sphi 0, %s116
      %s120 = sphi 0, %s119
      %s136 = sphi 0, %s120
    $region4: #{tpu_custom_call.1} parent=1 // loop_header_branch
      %20 = sbr.rel (%p18) target = $region8
    $region5: #{tpu_custom_call.1} parent=1 // loop_body
      %s22 = ssub.s32 %s17, 1
      %s23 = ssub.s32 %s17, 2
      %s24 = sadd.s32 %s17, 1
      %s25 = ssub.s32 %s17, %s24
      %p26 = scmp.eq.s32.totalorder %s25, 0
      %s28 = sadd.s32 %s27, 1
      %s29 = scalar_select %p26, %s27, %s28
      %p32 = pneg %p26
      %p33 = scmp.eq.s32.totalorder %s17, 1
      %p34 = por %p32, %p33
      %p35 = scmp.ne.s32.totalorder %s27, %s30
      %p36 = scmp.eq.s32.totalorder %s17, 0
      %p37 = por %p35, %p36
      %p38 = scmp.ne.s32.totalorder %s27, %s30
      %p39 = scmp.eq.s32.totalorder %s22, 1
      %p40 = por %p38, %p39
      %p41 = scmp.ne.s32.totalorder %s30, %s31
      %p42 = scmp.eq.s32.totalorder %s22, 0
      %p43 = por %p41, %p42
      %p44 = scmp.ne.s32.totalorder %s30, %s31
      %p45 = scmp.eq.s32.totalorder %s23, 1
      %p46 = por %p44, %p45
      %p48 = scmp.ne.s32.totalorder %s31, %s47
      %p49 = scmp.eq.s32.totalorder %s23, 0
      %p50 = por %p48, %p49
      %s52 = sadd.s32 %s51, 1
      %p55 = scmp.eq.s32.totalorder %s17, 1
      %p56 = scmp.ne.s32.totalorder %s51, %s53
      %p57 = scmp.eq.s32.totalorder %s17, 0
      %p58 = por %p56, %p57
      %p59 = scmp.ne.s32.totalorder %s51, %s53
      %p60 = scmp.eq.s32.totalorder %s22, 1
      %p61 = por %p59, %p60
      %p62 = scmp.ne.s32.totalorder %s53, %s54
      %p63 = scmp.eq.s32.totalorder %s22, 0
      %p64 = por %p62, %p63
      %p65 = scmp.ne.s32.totalorder %s53, %s54
      %p66 = scmp.eq.s32.totalorder %s23, 1
      %p67 = por %p65, %p66
      %p69 = scmp.ne.s32.totalorder %s54, %s68
      %p70 = scmp.eq.s32.totalorder %s23, 0
      %p71 = por %p69, %p70
      %s73 = sadd.s32 %s72, 1
      %p76 = scmp.eq.s32.totalorder %s17, 1
      %p77 = scmp.ne.s32.totalorder %s72, %s74
      %p78 = scmp.eq.s32.totalorder %s17, 0
      %p79 = por %p77, %p78
      %p80 = scmp.ne.s32.totalorder %s72, %s74
      %p81 = scmp.eq.s32.totalorder %s22, 1
      %p82 = por %p80, %p81
      %p83 = scmp.ne.s32.totalorder %s74, %s75
      %p84 = scmp.eq.s32.totalorder %s22, 0
      %p85 = por %p83, %p84
      %p86 = scmp.ne.s32.totalorder %s74, %s75
      %p87 = scmp.eq.s32.totalorder %s23, 1
      %p88 = por %p86, %p87
      %p90 = scmp.ne.s32.totalorder %s75, %s89
      %p91 = scmp.eq.s32.totalorder %s23, 0
      %p92 = por %p90, %p91
      %s94 = sadd.s32 %s93, 1
      %p97 = scmp.eq.s32.totalorder %s17, 1
      %p98 = scmp.ne.s32.totalorder %s93, %s95
      %p99 = scmp.eq.s32.totalorder %s17, 0
      %p100 = por %p98, %p99
      %p101 = scmp.ne.s32.totalorder %s93, %s95
      %p102 = scmp.eq.s32.totalorder %s22, 1
      %p103 = por %p101, %p102
      %p104 = scmp.ne.s32.totalorder %s95, %s96
      %p105 = scmp.eq.s32.totalorder %s22, 0
      %p106 = por %p104, %p105
      %p107 = scmp.ne.s32.totalorder %s95, %s96
      %p108 = scmp.eq.s32.totalorder %s23, 1
      %p109 = por %p107, %p108
      %p111 = scmp.ne.s32.totalorder %s96, %s110
      %p112 = scmp.eq.s32.totalorder %s23, 0
      %p113 = por %p111, %p112
      %s114 = ssub.s32 %s17, %s24
      %p115 = scmp.eq.s32.totalorder %s114, 0
      %s117 = sadd.s32 %s116, 1
      %s118 = scalar_select %p115, %s116, %s117
      %p121 = pneg %p115
      %p122 = scmp.eq.s32.totalorder %s17, 1
      %p123 = por %p121, %p122
      %p124 = scmp.ne.s32.totalorder %s116, %s119
      %p125 = scmp.eq.s32.totalorder %s17, 0
      %p126 = por %p124, %p125
      %p127 = scmp.ne.s32.totalorder %s116, %s119
      %p128 = scmp.eq.s32.totalorder %s22, 1
      %p129 = por %p127, %p128
      %p130 = scmp.ne.s32.totalorder %s119, %s120
      %p131 = scmp.eq.s32.totalorder %s22, 0
      %p132 = por %p130, %p131
      %p133 = scmp.ne.s32.totalorder %s119, %s120
      %p134 = scmp.eq.s32.totalorder %s23, 1
      %p135 = por %p133, %p134
      %p137 = scmp.ne.s32.totalorder %s120, %s136
      %p138 = scmp.eq.s32.totalorder %s23, 0
      %p139 = por %p137, %p138
      %p140 = scmp.le.s32.totalorder 1, %s17
      %p141 = scmp.lt.s32.totalorder %s17, 3
      %p142 = pnand %p140, %p141
      %p143 = pneg %p142
      // Predicated region
      $region9: #{tpu_custom_call.1} parent=5 // pred_check
        _
      $region10: #{tpu_custom_call.1} parent=5 // pred_check_branch
        %145 = sbr.rel (%p142) target = $region12
      $region11: #{tpu_custom_call.1} parent=5 // pred_region
        %s146 = ssub.s32 %s17, 1
        // Predicated region
        $region13: #{tpu_custom_call.1} parent=11 // pred_check
          %p147 = pneg %p64
        $region14: #{tpu_custom_call.1} parent=11 // pred_check_branch
          %149 = sbr.rel (%p147) target = $region16
        $region15: #{tpu_custom_call.1} parent=11 // pred_region
          %151 = vsyncadd [#allocation6], 0
          %s152 = sshll.u32 %s1, 4
          %s153 = int_to_ptr.hbm [resolvable:$true] %s152
          %s154 = sshll.u32 [#allocation5], 4
          %s155 = int_to_ptr.vmem [resolvable:$true] %s154
          %160 = dma.hbm_to_vmem [thread:$0]  %s153, 2048, %s155, [#allocation6], 256, 256, 16
        $region16: #{tpu_custom_call.1} parent=11 // pred_fallthru
          _
        // Predicated region
        $region17: #{tpu_custom_call.1} parent=11 // pred_check
          %p161 = pneg %p85
        $region18: #{tpu_custom_call.1} parent=11 // pred_check_branch
          %163 = sbr.rel (%p161) target = $region20
        $region19: #{tpu_custom_call.1} parent=11 // pred_region
          %165 = vsyncadd [#allocation6], 0
          %s166 = sshll.u32 %s2, 4
          %s167 = int_to_ptr.hbm [resolvable:$true] %s166
          %s168 = sshll.u32 [#allocation7], 4
          %s169 = int_to_ptr.vmem [resolvable:$true] %s168
          %174 = dma.hbm_to_vmem [thread:$0]  %s167, 1024, %s169, [#allocation6], 128, 128, 8
        $region20: #{tpu_custom_call.1} parent=11 // pred_fallthru
          _
        // Predicated region
        $region21: #{tpu_custom_call.1} parent=11 // pred_check
          %p175 = pneg %p106
        $region22: #{tpu_custom_call.1} parent=11 // pred_check_branch
          %177 = sbr.rel (%p175) target = $region24
        $region23: #{tpu_custom_call.1} parent=11 // pred_region
          _
        $region24: #{tpu_custom_call.1} parent=11 // pred_fallthru
          _
      $region12: #{tpu_custom_call.1} parent=5 // pred_fallthru
        _
      %p178 = scmp.lt.s32.totalorder %s17, 2
      // Predicated region
      $region25: #{tpu_custom_call.1} parent=5 // pred_check
        %p179 = pneg %p178
      $region26: #{tpu_custom_call.1} parent=5 // pred_check_branch
        %181 = sbr.rel (%p179) target = $region28
      $region27: #{tpu_custom_call.1} parent=5 // pred_region
        // Predicated region
        $region29: #{tpu_custom_call.1} parent=27 // pred_check
          %p182 = pneg %p37
        $region30: #{tpu_custom_call.1} parent=27 // pred_check_branch
          %184 = sbr.rel (%p182) target = $region32
        $region31: #{tpu_custom_call.1} parent=27 // pred_region
          %s185 = sand.u32 %s27, 1
          %s186 = scalar_lea.sflag [#allocation3], %s185
          %s187 = sand.u32 %s27, 1
          %s188 = smul.addr %s187, 16
          %s189 = scalar_lea.vmem [#allocation2], %s188
          %191 = vsyncadd %s186, 0
          %s192 = smul.addr %s17, 2
          %s193 = smul.addr %s192, 8
          %s194 = scalar_lea.hbm %s0, %s193
          %s195 = sshll.u32 %s194, 4
          %s196 = int_to_ptr.hbm [resolvable:$true] %s195
          %s197 = sshll.u32 %s189, 4
          %s198 = int_to_ptr.vmem [resolvable:$true] %s197
          %203 = dma.hbm_to_vmem [thread:$0]  %s196, 256, %s198, %s186, 128, 128, 8
        $region32: #{tpu_custom_call.1} parent=27 // pred_fallthru
          _
      $region28: #{tpu_custom_call.1} parent=5 // pred_fallthru
        _
      %p204 = scmp.le.s32.totalorder 1, %s17
      %p205 = scmp.lt.s32.totalorder %s17, 3
      %p206 = pnand %p204, %p205
      %p207 = pneg %p206
      // Predicated region
      $region33: #{tpu_custom_call.1} parent=5 // pred_check
        _
      $region34: #{tpu_custom_call.1} parent=5 // pred_check_branch
        %209 = sbr.rel (%p206) target = $region36
      $region35: #{tpu_custom_call.1} parent=5 // pred_region
        %s210 = ssub.s32 %s17, 1
        %s211 = sand.u32 %s30, 1
        %s212 = scalar_lea.sflag [#allocation3], %s211
        %s213 = sand.u32 %s30, 1
        %s214 = smul.addr %s213, 16
        %s215 = scalar_lea.vmem [#allocation2], %s214
        // Predicated region
        $region37: #{tpu_custom_call.1} parent=35 // pred_check
          %p216 = pneg %p43
        $region38: #{tpu_custom_call.1} parent=35 // pred_check_branch
          %218 = sbr.rel (%p216) target = $region40
        $region39: #{tpu_custom_call.1} parent=35 // pred_region
          %220 = dma.done %s212, 256
        $region40: #{tpu_custom_call.1} parent=35 // pred_fallthru
          _
        // Predicated region
        $region41: #{tpu_custom_call.1} parent=35 // pred_check
          %p221 = pneg %p64
        $region42: #{tpu_custom_call.1} parent=35 // pred_check_branch
          %223 = sbr.rel (%p221) target = $region44
        $region43: #{tpu_custom_call.1} parent=35 // pred_region
          %225 = dma.done [#allocation6], 2048
        $region44: #{tpu_custom_call.1} parent=35 // pred_fallthru
          _
        // Predicated region
        $region45: #{tpu_custom_call.1} parent=35 // pred_check
          %p226 = pneg %p85
        $region46: #{tpu_custom_call.1} parent=35 // pred_check_branch
          %228 = sbr.rel (%p226) target = $region48
        $region47: #{tpu_custom_call.1} parent=35 // pred_region
          %230 = dma.done [#allocation6], 1024
        $region48: #{tpu_custom_call.1} parent=35 // pred_fallthru
          _
        %s231 = sand.u32 %s30, 1
        %s232 = scalar_lea.sflag [#allocation3], %s231
        %s233 = sand.u32 %s30, 1
        %s234 = smul.addr %s233, 16
        %s235 = scalar_lea.vmem [#allocation2], %s234
        %p236 = pneg %p43
        %p237 = pneg %p40
        %p238 = pneg %p64
        %p239 = pneg %p61
        %p240 = pneg %p85
        %p241 = pneg %p82
        %p242 = pneg %p106
        %p243 = pneg %p103
        %p244 = pneg %p132
        %p245 = pneg %p129
        %s246 = sand.u32 %s119, 1
        %s247 = scalar_lea.sflag [#allocation4], %s246
        %s248 = sand.u32 %s119, 1
        %s249 = smul.addr %s248, 16
        %s250 = scalar_lea.vmem [#allocation8], %s249
        %v251 = vld [vmem:[%s215] sm:$0xff]
        %v252 = vld [vmem:[%s215 + $0x8] sm:$0xff]
        %v253 = vld [vmem:[#allocation5] sm:$0xff]
        %v254 = vld [vmem:[#allocation5 + $0x8] sm:$0xff]
        %v255 = vld [vmem:[#allocation5 + $0x10] sm:$0xff]
        %v256 = vld [vmem:[#allocation5 + $0x18] sm:$0xff]
        %v257 = vld [vmem:[#allocation5 + $0x20] sm:$0xff]
        %v258 = vld [vmem:[#allocation5 + $0x28] sm:$0xff]
        %v259 = vld [vmem:[#allocation5 + $0x30] sm:$0xff]
        %v260 = vld [vmem:[#allocation5 + $0x38] sm:$0xff]
        %v261 = vld [vmem:[#allocation5 + $0x40] sm:$0xff]
        %v262 = vld [vmem:[#allocation5 + $0x48] sm:$0xff]
        %v263 = vld [vmem:[#allocation5 + $0x50] sm:$0xff]
        %v264 = vld [vmem:[#allocation5 + $0x58] sm:$0xff]
        %v265 = vld [vmem:[#allocation5 + $0x60] sm:$0xff]
        %v266 = vld [vmem:[#allocation5 + $0x68] sm:$0xff]
        %v267 = vld [vmem:[#allocation5 + $0x70] sm:$0xff]
        %v268 = vld [vmem:[#allocation5 + $0x78] sm:$0xff]
        %vm269 = vcmask 523264
        %v271 = vsel %vm269, %v251, 0
        %v274 = vsel %vm269, %v252, 0
        %276 = vmatpush.msra.mxu0 0.0
        %277 = vmatpush.msra.mxu0 0.0
        %278 = vmatpush.msra.mxu0 0.0
        %279 = vmatpush.msra.mxu0 0.0
        %280 = vmatpush.msra.mxu0 0.0
        %281 = vmatpush.msra.mxu0 0.0
        %282 = vmatpush.msra.mxu0 0.0
        %283 = vmatpush.msra.mxu0 0.0
        %284 = vmatpush.msra.mxu0 %v267
        %285 = vmatpush.msra.mxu0 %v265
        %286 = vmatpush.msra.mxu0 %v263
        %287 = vmatpush.msra.mxu0 %v261
        %288 = vmatpush.msra.mxu0 %v259
        %289 = vmatpush.msra.mxu0 %v257
        %290 = vmatpush.msra.mxu0 %v255
        %291 = vmatpush.msra.mxu0 %v253
        %292 = vmatmul.f32.gmra.mxu0 %v271
        %v293 = vpop.f32.mrf.mxu0
        %v294 = vadd.f32 0.0, %v293
        %295 = vmatmul.f32.gmra.mxu0 %v274
        %v296 = vpop.f32.mrf.mxu0
        %v297 = vadd.f32 0.0, %v296
        %298 = vdwg.mxu0
        %299 = vmatpush.msra.mxu0 0.0
        %300 = vmatpush.msra.mxu0 0.0
        %301 = vmatpush.msra.mxu0 0.0
        %302 = vmatpush.msra.mxu0 0.0
        %303 = vmatpush.msra.mxu0 0.0
        %304 = vmatpush.msra.mxu0 0.0
        %305 = vmatpush.msra.mxu0 0.0
        %306 = vmatpush.msra.mxu0 0.0
        %307 = vmatpush.msra.mxu0 %v268
        %308 = vmatpush.msra.mxu0 %v266
        %309 = vmatpush.msra.mxu0 %v264
        %310 = vmatpush.msra.mxu0 %v262
        %311 = vmatpush.msra.mxu0 %v260
        %312 = vmatpush.msra.mxu0 %v258
        %313 = vmatpush.msra.mxu0 %v256
        %314 = vmatpush.msra.mxu0 %v254
        %315 = vmatmul.f32.gmra.mxu0 %v271
        %v316 = vpop.f32.mrf.mxu0
        %v317 = vadd.f32 0.0, %v316
        %318 = vmatmul.f32.gmra.mxu0 %v274
        %v319 = vpop.f32.mrf.mxu0
        %v320 = vadd.f32 0.0, %v319
        %321 = vdwg.mxu0
        %v322 = vlaneseq
        %v323 = vshrl.u32 %v322, 7
        %v324 = vadd.s32 %v323, 8
        %v325 = vlaneseq
        %v326 = vand.u32 %v325, 127
        %vm327 = vcmp.le.s32.totalorder %v326, %v323
        %vm328 = vcmp.le.s32.totalorder %v326, %v324
        %331 = vrot.lane.b32.xlu0 %v294, 64
        %v332 = vpop.permute.xlu0 %331
        %333 = vrot.lane.b32.xlu0 %v297, 64
        %v334 = vpop.permute.xlu0 %333
        %vm335 = vcmask 130048
        %v336 = vsel %vm335, %v294, 0
        %v338 = vsel %vm335, %v297, 0
        %v340 = vsel %vm335, %v332, 0
        %v342 = vsel %vm335, %v334, 0
        %344 = vmatpush.xpose.msra.mxu0 0.0
        %345 = vmatpush.xpose.msra.mxu0 0.0
        %346 = vmatpush.xpose.msra.mxu0 0.0
        %347 = vmatpush.xpose.msra.mxu0 0.0
        %348 = vmatpush.xpose.msra.mxu0 0.0
        %349 = vmatpush.xpose.msra.mxu0 0.0
        %350 = vmatpush.xpose.msra.mxu0 0.0
        %351 = vmatpush.xpose.msra.mxu0 0.0
        %352 = vmatpush.xpose.msra.mxu0 0.0
        %353 = vmatpush.xpose.msra.mxu0 0.0
        %354 = vmatpush.xpose.msra.mxu0 0.0
        %355 = vmatpush.xpose.msra.mxu0 0.0
        %356 = vmatpush.xpose.msra.mxu0 0.0
        %357 = vmatpush.xpose.msra.mxu0 0.0
        %358 = vmatpush.xpose.msra.mxu0 %v342
        %359 = vmatpush.xpose.msra.mxu0 %v340
        %360 = vmatmul.f32.gmra.mxu0 %v336
        %v361 = vpop.f32.mrf.mxu0
        %v362 = vadd.f32 0.0, %v361
        %363 = vmatmul.f32.gmra.mxu0 %v338
        %v364 = vpop.f32.mrf.mxu0
        %v365 = vadd.f32 0.0, %v364
        %366 = vdwg.mxu0
        %v367 = vmul.f32 %v362, 0.125
        %v368 = vmul.f32 %v365, 0.125
        %v369 = vsel %vm327, %v367, -inf
        %v370 = vsel %vm328, %v368, -inf
        %v371 = vsel %vm335, %v369, -inf
        %372 = vmax.xlane.f32.xlu0 %v371
        %v373 = vpop.xlane.xlu0 %372
        %v374 = vsel %vm335, %v370, -inf
        %375 = vmax.xlane.f32.xlu0 %v374
        %v376 = vpop.xlane.xlu0 %375
        %v377 = vsub.f32 %v369, %v373
        %v378 = vsub.f32 %v370, %v376
        %v379 = vmul.f32 %v377, 1.442695
        %v380 = vpow.pop %v379
        %v381 = vmul.f32 %v378, 1.442695
        %v382 = vpow.pop %v381
        %v383 = vsel %vm335, %v380, 0.0
        %384 = vadd.xlane.f32.xlu0 %v383
        %v385 = vpop.xlane.xlu0 %384
        %v386 = vsel %vm335, %v382, 0.0
        %387 = vadd.xlane.f32.xlu0 %v386
        %v388 = vpop.xlane.xlu0 %387
        %v389 = vrcp.pop %v385
        %v390 = vrcp.pop %v388
        %v391 = vmul.f32 %v380, %v389
        %v392 = vmul.f32 %v382, %v390
        %v394 = vsel %vm335, %v391, 0
        %v397 = vsel %vm335, %v392, 0
        %399 = vmatpush.msra.mxu0 0.0
        %400 = vmatpush.msra.mxu0 0.0
        %401 = vmatpush.msra.mxu0 0.0
        %402 = vmatpush.msra.mxu0 0.0
        %403 = vmatpush.msra.mxu0 0.0
        %404 = vmatpush.msra.mxu0 0.0
        %405 = vmatpush.msra.mxu0 0.0
        %406 = vmatpush.msra.mxu0 0.0
        %407 = vmatpush.msra.mxu0 0.0
        %408 = vmatpush.msra.mxu0 0.0
        %409 = vmatpush.msra.mxu0 0.0
        %410 = vmatpush.msra.mxu0 0.0
        %411 = vmatpush.msra.mxu0 0.0
        %412 = vmatpush.msra.mxu0 0.0
        %413 = vmatpush.msra.mxu0 %v320
        %414 = vmatpush.msra.mxu0 %v317
        %415 = vmatmul.f32.gmra.mxu0 %v394
        %v416 = vpop.f32.mrf.mxu0
        %v417 = vadd.f32 0.0, %v416
        %418 = vmatmul.f32.gmra.mxu0 %v397
        %v419 = vpop.f32.mrf.mxu0
        %v420 = vadd.f32 0.0, %v419
        %421 = vdwg.mxu0
        %422 = vrot.lane.b32.xlu0 %v294, 112
        %v423 = vpop.permute.xlu0 %422
        %424 = vrot.lane.b32.xlu0 %v297, 112
        %v425 = vpop.permute.xlu0 %424
        %426 = vrot.lane.b32.xlu0 %v294, 48
        %v427 = vpop.permute.xlu0 %426
        %428 = vrot.lane.b32.xlu0 %v297, 48
        %v429 = vpop.permute.xlu0 %428
        %v430 = vsel %vm335, %v423, 0
        %v432 = vsel %vm335, %v425, 0
        %v434 = vsel %vm335, %v427, 0
        %v436 = vsel %vm335, %v429, 0
        %438 = vmatpush.xpose.msra.mxu0 0.0
        %439 = vmatpush.xpose.msra.mxu0 0.0
        %440 = vmatpush.xpose.msra.mxu0 0.0
        %441 = vmatpush.xpose.msra.mxu0 0.0
        %442 = vmatpush.xpose.msra.mxu0 0.0
        %443 = vmatpush.xpose.msra.mxu0 0.0
        %444 = vmatpush.xpose.msra.mxu0 0.0
        %445 = vmatpush.xpose.msra.mxu0 0.0
        %446 = vmatpush.xpose.msra.mxu0 0.0
        %447 = vmatpush.xpose.msra.mxu0 0.0
        %448 = vmatpush.xpose.msra.mxu0 0.0
        %449 = vmatpush.xpose.msra.mxu0 0.0
        %450 = vmatpush.xpose.msra.mxu0 0.0
        %451 = vmatpush.xpose.msra.mxu0 0.0
        %452 = vmatpush.xpose.msra.mxu0 %v436
        %453 = vmatpush.xpose.msra.mxu0 %v434
        %454 = vmatmul.f32.gmra.mxu0 %v430
        %v455 = vpop.f32.mrf.mxu0
        %v456 = vadd.f32 0.0, %v455
        %457 = vmatmul.f32.gmra.mxu0 %v432
        %v458 = vpop.f32.mrf.mxu0
        %v459 = vadd.f32 0.0, %v458
        %460 = vdwg.mxu0
        %v461 = vmul.f32 %v456, 0.125
        %v462 = vmul.f32 %v459, 0.125
        %v463 = vsel %vm327, %v461, -inf
        %v464 = vsel %vm328, %v462, -inf
        %v465 = vsel %vm335, %v463, -inf
        %466 = vmax.xlane.f32.xlu0 %v465
        %v467 = vpop.xlane.xlu0 %466
        %v468 = vsel %vm335, %v464, -inf
        %469 = vmax.xlane.f32.xlu0 %v468
        %v470 = vpop.xlane.xlu0 %469
        %v471 = vsub.f32 %v463, %v467
        %v472 = vsub.f32 %v464, %v470
        %v473 = vmul.f32 %v471, 1.442695
        %v474 = vpow.pop %v473
        %v475 = vmul.f32 %v472, 1.442695
        %v476 = vpow.pop %v475
        %v477 = vsel %vm335, %v474, 0.0
        %478 = vadd.xlane.f32.xlu0 %v477
        %v479 = vpop.xlane.xlu0 %478
        %v480 = vsel %vm335, %v476, 0.0
        %481 = vadd.xlane.f32.xlu0 %v480
        %v482 = vpop.xlane.xlu0 %481
        %v483 = vrcp.pop %v479
        %v484 = vrcp.pop %v482
        %v485 = vmul.f32 %v474, %v483
        %v486 = vmul.f32 %v476, %v484
        %489 = vrot.lane.b32.xlu0 %v317, 112
        %v490 = vpop.permute.xlu0 %489
        %491 = vrot.lane.b32.xlu0 %v320, 112
        %v492 = vpop.permute.xlu0 %491
        %v496 = vsel %vm335, %v485, 0
        %v499 = vsel %vm335, %v486, 0
        %501 = vmatpush.msra.mxu0 0.0
        %502 = vmatpush.msra.mxu0 0.0
        %503 = vmatpush.msra.mxu0 0.0
        %504 = vmatpush.msra.mxu0 0.0
        %505 = vmatpush.msra.mxu0 0.0
        %506 = vmatpush.msra.mxu0 0.0
        %507 = vmatpush.msra.mxu0 0.0
        %508 = vmatpush.msra.mxu0 0.0
        %509 = vmatpush.msra.mxu0 0.0
        %510 = vmatpush.msra.mxu0 0.0
        %511 = vmatpush.msra.mxu0 0.0
        %512 = vmatpush.msra.mxu0 0.0
        %513 = vmatpush.msra.mxu0 0.0
        %514 = vmatpush.msra.mxu0 0.0
        %515 = vmatpush.msra.mxu0 %v492
        %516 = vmatpush.msra.mxu0 %v490
        %517 = vmatmul.f32.gmra.mxu0 %v496
        %v518 = vpop.f32.mrf.mxu0
        %v519 = vadd.f32 0.0, %v518
        %520 = vmatmul.f32.gmra.mxu0 %v499
        %v521 = vpop.f32.mrf.mxu0
        %v522 = vadd.f32 0.0, %v521
        %523 = vdwg.mxu0
        %524 = vrot.lane.b32.xlu0 %v294, 96
        %v525 = vpop.permute.xlu0 %524
        %526 = vrot.lane.b32.xlu0 %v297, 96
        %v527 = vpop.permute.xlu0 %526
        %528 = vrot.lane.b32.xlu0 %v294, 32
        %v529 = vpop.permute.xlu0 %528
        %530 = vrot.lane.b32.xlu0 %v297, 32
        %v531 = vpop.permute.xlu0 %530
        %v532 = vsel %vm335, %v525, 0
        %v534 = vsel %vm335, %v527, 0
        %v536 = vsel %vm335, %v529, 0
        %v538 = vsel %vm335, %v531, 0
        %540 = vmatpush.xpose.msra.mxu0 0.0
        %541 = vmatpush.xpose.msra.mxu0 0.0
        %542 = vmatpush.xpose.msra.mxu0 0.0
        %543 = vmatpush.xpose.msra.mxu0 0.0
        %544 = vmatpush.xpose.msra.mxu0 0.0
        %545 = vmatpush.xpose.msra.mxu0 0.0
        %546 = vmatpush.xpose.msra.mxu0 0.0
        %547 = vmatpush.xpose.msra.mxu0 0.0
        %548 = vmatpush.xpose.msra.mxu0 0.0
        %549 = vmatpush.xpose.msra.mxu0 0.0
        %550 = vmatpush.xpose.msra.mxu0 0.0
        %551 = vmatpush.xpose.msra.mxu0 0.0
        %552 = vmatpush.xpose.msra.mxu0 0.0
        %553 = vmatpush.xpose.msra.mxu0 0.0
        %554 = vmatpush.xpose.msra.mxu0 %v538
        %555 = vmatpush.xpose.msra.mxu0 %v536
        %556 = vmatmul.f32.gmra.mxu0 %v532
        %v557 = vpop.f32.mrf.mxu0
        %v558 = vadd.f32 0.0, %v557
        %559 = vmatmul.f32.gmra.mxu0 %v534
        %v560 = vpop.f32.mrf.mxu0
        %v561 = vadd.f32 0.0, %v560
        %562 = vdwg.mxu0
        %v563 = vmul.f32 %v558, 0.125
        %v564 = vmul.f32 %v561, 0.125
        %v565 = vsel %vm327, %v563, -inf
        %v566 = vsel %vm328, %v564, -inf
        %v567 = vsel %vm335, %v565, -inf
        %568 = vmax.xlane.f32.xlu0 %v567
        %v569 = vpop.xlane.xlu0 %568
        %v570 = vsel %vm335, %v566, -inf
        %571 = vmax.xlane.f32.xlu0 %v570
        %v572 = vpop.xlane.xlu0 %571
        %v573 = vsub.f32 %v565, %v569
        %v574 = vsub.f32 %v566, %v572
        %v575 = vmul.f32 %v573, 1.442695
        %v576 = vpow.pop %v575
        %v577 = vmul.f32 %v574, 1.442695
        %v578 = vpow.pop %v577
        %v579 = vsel %vm335, %v576, 0.0
        %580 = vadd.xlane.f32.xlu0 %v579
        %v581 = vpop.xlane.xlu0 %580
        %v582 = vsel %vm335, %v578, 0.0
        %583 = vadd.xlane.f32.xlu0 %v582
        %v584 = vpop.xlane.xlu0 %583
        %v585 = vrcp.pop %v581
        %v586 = vrcp.pop %v584
        %v587 = vmul.f32 %v576, %v585
        %v588 = vmul.f32 %v578, %v586
        %589 = vrot.lane.b32.xlu0 %v317, 96
        %v590 = vpop.permute.xlu0 %589
        %591 = vrot.lane.b32.xlu0 %v320, 96
        %v592 = vpop.permute.xlu0 %591
        %v596 = vsel %vm335, %v587, 0
        %v599 = vsel %vm335, %v588, 0
        %601 = vmatpush.msra.mxu0 0.0
        %602 = vmatpush.msra.mxu0 0.0
        %603 = vmatpush.msra.mxu0 0.0
        %604 = vmatpush.msra.mxu0 0.0
        %605 = vmatpush.msra.mxu0 0.0
        %606 = vmatpush.msra.mxu0 0.0
        %607 = vmatpush.msra.mxu0 0.0
        %608 = vmatpush.msra.mxu0 0.0
        %609 = vmatpush.msra.mxu0 0.0
        %610 = vmatpush.msra.mxu0 0.0
        %611 = vmatpush.msra.mxu0 0.0
        %612 = vmatpush.msra.mxu0 0.0
        %613 = vmatpush.msra.mxu0 0.0
        %614 = vmatpush.msra.mxu0 0.0
        %615 = vmatpush.msra.mxu0 %v592
        %616 = vmatpush.msra.mxu0 %v590
        %617 = vmatmul.f32.gmra.mxu0 %v596
        %v618 = vpop.f32.mrf.mxu0
        %v619 = vadd.f32 0.0, %v618
        %620 = vmatmul.f32.gmra.mxu0 %v599
        %v621 = vpop.f32.mrf.mxu0
        %v622 = vadd.f32 0.0, %v621
        %623 = vdwg.mxu0
        %624 = vrot.lane.b32.xlu0 %v294, 80
        %v625 = vpop.permute.xlu0 %624
        %626 = vrot.lane.b32.xlu0 %v297, 80
        %v627 = vpop.permute.xlu0 %626
        %628 = vrot.lane.b32.xlu0 %v294, 16
        %v629 = vpop.permute.xlu0 %628
        %630 = vrot.lane.b32.xlu0 %v297, 16
        %v631 = vpop.permute.xlu0 %630
        %v632 = vsel %vm335, %v625, 0
        %v634 = vsel %vm335, %v627, 0
        %v636 = vsel %vm335, %v629, 0
        %v638 = vsel %vm335, %v631, 0
        %640 = vmatpush.xpose.msra.mxu0 0.0
        %641 = vmatpush.xpose.msra.mxu0 0.0
        %642 = vmatpush.xpose.msra.mxu0 0.0
        %643 = vmatpush.xpose.msra.mxu0 0.0
        %644 = vmatpush.xpose.msra.mxu0 0.0
        %645 = vmatpush.xpose.msra.mxu0 0.0
        %646 = vmatpush.xpose.msra.mxu0 0.0
        %647 = vmatpush.xpose.msra.mxu0 0.0
        %648 = vmatpush.xpose.msra.mxu0 0.0
        %649 = vmatpush.xpose.msra.mxu0 0.0
        %650 = vmatpush.xpose.msra.mxu0 0.0
        %651 = vmatpush.xpose.msra.mxu0 0.0
        %652 = vmatpush.xpose.msra.mxu0 0.0
        %653 = vmatpush.xpose.msra.mxu0 0.0
        %654 = vmatpush.xpose.msra.mxu0 %v638
        %655 = vmatpush.xpose.msra.mxu0 %v636
        %656 = vmatmul.f32.gmra.mxu0 %v632
        %v657 = vpop.f32.mrf.mxu0
        %v658 = vadd.f32 0.0, %v657
        %659 = vmatmul.f32.gmra.mxu0 %v634
        %v660 = vpop.f32.mrf.mxu0
        %v661 = vadd.f32 0.0, %v660
        %662 = vdwg.mxu0
        %v663 = vmul.f32 %v658, 0.125
        %v664 = vmul.f32 %v661, 0.125
        %v665 = vsel %vm327, %v663, -inf
        %v666 = vsel %vm328, %v664, -inf
        %v667 = vsel %vm335, %v665, -inf
        %668 = vmax.xlane.f32.xlu0 %v667
        %v669 = vpop.xlane.xlu0 %668
        %v670 = vsel %vm335, %v666, -inf
        %671 = vmax.xlane.f32.xlu0 %v670
        %v672 = vpop.xlane.xlu0 %671
        %v673 = vsub.f32 %v665, %v669
        %v674 = vsub.f32 %v666, %v672
        %v675 = vmul.f32 %v673, 1.442695
        %v676 = vpow.pop %v675
        %v677 = vmul.f32 %v674, 1.442695
        %v678 = vpow.pop %v677
        %v679 = vsel %vm335, %v676, 0.0
        %680 = vadd.xlane.f32.xlu0 %v679
        %v681 = vpop.xlane.xlu0 %680
        %v682 = vsel %vm335, %v678, 0.0
        %683 = vadd.xlane.f32.xlu0 %v682
        %v684 = vpop.xlane.xlu0 %683
        %v685 = vrcp.pop %v681
        %v686 = vrcp.pop %v684
        %v687 = vmul.f32 %v676, %v685
        %v688 = vmul.f32 %v678, %v686
        %689 = vrot.lane.b32.xlu0 %v317, 80
        %v690 = vpop.permute.xlu0 %689
        %691 = vrot.lane.b32.xlu0 %v320, 80
        %v692 = vpop.permute.xlu0 %691
        %v696 = vsel %vm335, %v687, 0
        %v699 = vsel %vm335, %v688, 0
        %701 = vmatpush.msra.mxu0 0.0
        %702 = vmatpush.msra.mxu0 0.0
        %703 = vmatpush.msra.mxu0 0.0
        %704 = vmatpush.msra.mxu0 0.0
        %705 = vmatpush.msra.mxu0 0.0
        %706 = vmatpush.msra.mxu0 0.0
        %707 = vmatpush.msra.mxu0 0.0
        %708 = vmatpush.msra.mxu0 0.0
        %709 = vmatpush.msra.mxu0 0.0
        %710 = vmatpush.msra.mxu0 0.0
        %711 = vmatpush.msra.mxu0 0.0
        %712 = vmatpush.msra.mxu0 0.0
        %713 = vmatpush.msra.mxu0 0.0
        %714 = vmatpush.msra.mxu0 0.0
        %715 = vmatpush.msra.mxu0 %v692
        %716 = vmatpush.msra.mxu0 %v690
        %717 = vmatmul.f32.gmra.mxu0 %v696
        %v718 = vpop.f32.mrf.mxu0
        %v719 = vadd.f32 0.0, %v718
        %720 = vmatmul.f32.gmra.mxu0 %v699
        %v721 = vpop.f32.mrf.mxu0
        %v722 = vadd.f32 0.0, %v721
        %723 = vdwg.mxu0
        %726 = vrot.lane.b32.xlu0 %v519, 16
        %v727 = vpop.permute.xlu0 %726
        %728 = vrot.lane.b32.xlu0 %v522, 16
        %v729 = vpop.permute.xlu0 %728
        %734 = vrot.lane.b32.xlu0 %v619, 32
        %v735 = vpop.permute.xlu0 %734
        %736 = vrot.lane.b32.xlu0 %v622, 32
        %v737 = vpop.permute.xlu0 %736
        %742 = vrot.lane.b32.xlu0 %v719, 48
        %v743 = vpop.permute.xlu0 %742
        %744 = vrot.lane.b32.xlu0 %v722, 48
        %v745 = vpop.permute.xlu0 %744
        %v748 = vsel %vm335, %v417, %v727
        %v749 = vsel %vm335, %v420, %v729
        %vm750 = vcmask 261120
        %v751 = vsel %vm750, %v748, %v735
        %v752 = vsel %vm750, %v749, %v737
        %vm753 = vcmask 392192
        %v754 = vsel %vm753, %v751, %v743
        %v755 = vsel %vm753, %v752, %v745
        %v756 = vld [vmem:[#allocation7] sm:$0xff]
        %v757 = vld [vmem:[#allocation7 + $0x8] sm:$0xff]
        %v758 = vld [vmem:[#allocation7 + $0x10] sm:$0xff]
        %v759 = vld [vmem:[#allocation7 + $0x18] sm:$0xff]
        %v760 = vld [vmem:[#allocation7 + $0x20] sm:$0xff]
        %v761 = vld [vmem:[#allocation7 + $0x28] sm:$0xff]
        %v762 = vld [vmem:[#allocation7 + $0x30] sm:$0xff]
        %v763 = vld [vmem:[#allocation7 + $0x38] sm:$0xff]
        %v764 = vld [vmem:[%s3] sm:$0x1]
        %v766 = vperm.slane %v764, 0
        %v769 = vsel %vm269, %v754, 0
        %v772 = vsel %vm269, %v755, 0
        %774 = vmatpush.msra.mxu0 0.0
        %775 = vmatpush.msra.mxu0 0.0
        %776 = vmatpush.msra.mxu0 0.0
        %777 = vmatpush.msra.mxu0 0.0
        %778 = vmatpush.msra.mxu0 0.0
        %779 = vmatpush.msra.mxu0 0.0
        %780 = vmatpush.msra.mxu0 0.0
        %781 = vmatpush.msra.mxu0 0.0
        %782 = vmatpush.msra.mxu0 %v763
        %783 = vmatpush.msra.mxu0 %v762
        %784 = vmatpush.msra.mxu0 %v761
        %785 = vmatpush.msra.mxu0 %v760
        %786 = vmatpush.msra.mxu0 %v759
        %787 = vmatpush.msra.mxu0 %v758
        %788 = vmatpush.msra.mxu0 %v757
        %789 = vmatpush.msra.mxu0 %v756
        %790 = vmatmul.f32.gmra.mxu0 %v769
        %v791 = vpop.f32.mrf.mxu0
        %v792 = vadd.f32 %v766, %v791
        %793 = vmatmul.f32.gmra.mxu0 %v772
        %v794 = vpop.f32.mrf.mxu0
        %v795 = vadd.f32 %v766, %v794
        %796 = vdwg.mxu0
        %797 = vst.msk [vmem:[%s250] sm:$0xff] %vm269, %v792
        %798 = vst.msk [vmem:[%s250 + $0x8] sm:$0xff] %vm269, %v795
        %s799 = sand.u32 %s119, 1
        %s800 = scalar_lea.sflag [#allocation4], %s799
        %s801 = sand.u32 %s119, 1
        %s802 = smul.addr %s801, 16
        %s803 = scalar_lea.vmem [#allocation8], %s802
        // Predicated region
        $region49: #{tpu_custom_call.1} parent=35 // pred_check
          %p804 = pneg %p129
        $region50: #{tpu_custom_call.1} parent=35 // pred_check_branch
          %806 = sbr.rel (%p804) target = $region52
        $region51: #{tpu_custom_call.1} parent=35 // pred_region
          %808 = vsyncadd %s800, 0
          %s809 = smul.addr %s22, 2
          %s810 = smul.addr %s809, 8
          %s811 = scalar_lea.hbm %s4, %s810
          %s812 = sshll.u32 %s803, 4
          %s813 = int_to_ptr.vmem [resolvable:$true] %s812
          %s814 = sshll.u32 %s811, 4
          %s815 = int_to_ptr.hbm [resolvable:$true] %s814
          %820 = dma.vmem_to_hbm [thread:$0]  %s813, 256, %s815, %s800, 128, 128, 8
        $region52: #{tpu_custom_call.1} parent=35 // pred_fallthru
          _
      $region36: #{tpu_custom_call.1} parent=5 // pred_fallthru
        _
      %p821 = scmp.le.s32.totalorder 2, %s17
      // Predicated region
      $region53: #{tpu_custom_call.1} parent=5 // pred_check
        %p822 = pneg %p821
      $region54: #{tpu_custom_call.1} parent=5 // pred_check_branch
        %824 = sbr.rel (%p822) target = $region56
      $region55: #{tpu_custom_call.1} parent=5 // pred_region
        %s825 = ssub.s32 %s17, 2
        // Predicated region
        $region57: #{tpu_custom_call.1} parent=55 // pred_check
          %p826 = pneg %p135
        $region58: #{tpu_custom_call.1} parent=55 // pred_check_branch
          %828 = sbr.rel (%p826) target = $region60
        $region59: #{tpu_custom_call.1} parent=55 // pred_region
          %s829 = sand.u32 %s120, 1
          %s830 = scalar_lea.sflag [#allocation4], %s829
          %s831 = sand.u32 %s120, 1
          %s832 = smul.addr %s831, 16
          %s833 = scalar_lea.vmem [#allocation8], %s832
          %835 = dma.done %s830, 256
        $region60: #{tpu_custom_call.1} parent=55 // pred_fallthru
          _
      $region56: #{tpu_custom_call.1} parent=5 // pred_fallthru
        _
    $region6: #{tpu_custom_call.1} parent=1 // loop_footer
      %s21 = sadd.s32 1, %s17
    $region7: #{tpu_custom_call.1} parent=1 // loop_footer_branch
      %16 = sbr.rel target = $region3
    $region8: #{tpu_custom_call.1} parent=1 // loop_exit
      _
    %836 = vsyncpa [#allocation3], 1
    %s837 = scalar_lea.sflag [#allocation3], 1
    %838 = vsyncpa %s837, 1
    %839 = vsyncpa [#allocation6], 1
    %840 = vsyncpa [#allocation4], 1
    %s841 = scalar_lea.sflag [#allocation4], 1
    %842 = vsyncpa %s841, 1

</llo_original>
